<compile_context>
chip_gen: v5e
topology: v5e:2x2
jax: 0.10.0
libtpu: 0.0.40
codegen_flags: <defaults>
</compile_context>

<pallas_src>
import functools

import jax
import jax.numpy as jnp
from jax.experimental import pallas as pl
from jax.experimental.pallas import tpu as pltpu

EPS = 1e-5


def _round_up(x, mult):
    return ((x + mult - 1) // mult) * mult


def _pick_row_tile(m, cap=256):
    """Largest multiple-of-16 divisor of m that is <= cap (falls back to m).
    For large inputs a 512-1024 row cap amortizes per-grid-step overhead best."""
    for t in range(min(cap, m), 15, -1):
        if m % t == 0 and t % 16 == 0:
            return t
    return m


# --------------------------------------------------------------------------
# Stage 1: 1x1 conv (row-tiled matmul) + global BN + ReLU, two-phase grid.
# --------------------------------------------------------------------------
def conv1_bn_relu_kernel(x_ref, w_ref, g_ref, b_ref, o_ref, sum_ref, ssq_ref,
                         *, m_total):
    # x_ref: (tile_m, Cin) bf16, w_ref: (Cin, Cpad) bf16, g/b: (1, Cpad) f32
    # o_ref: (tile_m, Cpad) bf16, sum/ssq: (1, Cpad) f32 persistent scratch.
    phase = pl.program_id(0)
    tile = pl.program_id(1)
    last_tile = pl.num_programs(1) - 1

    @pl.when(jnp.logical_and(phase == 0, tile == 0))
    def _init():
        sum_ref[...] = jnp.zeros_like(sum_ref)
        ssq_ref[...] = jnp.zeros_like(ssq_ref)

    # bf16 x bf16 -> f32 accumulation on the MXU (same value in both phases).
    y = jnp.dot(x_ref[...], w_ref[...], preferred_element_type=jnp.float32)

    @pl.when(phase == 0)
    def _accumulate():
        sum_ref[...] += jnp.sum(y, axis=0, keepdims=True)
        ssq_ref[...] += jnp.sum(y * y, axis=0, keepdims=True)
        o_ref[...] = y.astype(o_ref.dtype)        # placeholder; overwritten in phase 1

    @pl.when(jnp.logical_and(phase == 0, tile == last_tile))
    def _finalize_stats():
        inv_cnt = 1.0 / m_total
        mean = sum_ref[...] * inv_cnt
        var = ssq_ref[...] * inv_cnt - mean * mean
        sum_ref[...] = mean                        # scratch now holds mean
        ssq_ref[...] = jax.lax.rsqrt(var + EPS)    # scratch now holds inv_std

    @pl.when(phase == 1)
    def _normalize():
        yn = (y - sum_ref[...]) * ssq_ref[...]
        o_ref[...] = jnp.maximum(yn * g_ref[...] + b_ref[...], 0.0).astype(o_ref.dtype)


# --------------------------------------------------------------------------
# Stage 2: 3x3 conv (per-image, halo in VMEM, im2col) + global BN + ReLU.
# --------------------------------------------------------------------------
def conv3_bn_relu_kernel(h_ref, w_ref, g_ref, b_ref, o_ref,
                         pad_ref, slab_ref, sum_ref, ssq_ref, *, n, h, w, c):
    # h_ref: (H, W, Cpad) bf16 (one image), w_ref: (9*Cpad, Cpad) bf16 im2col weights,
    # o_ref: (H, W, Cpad) f32, pad_ref: (H+2, W+2, Cpad) f32, slab_ref: (H*W, 9*Cpad) bf16.
    phase = pl.program_id(0)
    img = pl.program_id(1)
    last_img = pl.num_programs(1) - 1
    m = h * w

    @pl.when(jnp.logical_and(phase == 0, img == 0))
    def _init():
        # Zero once: the interior is overwritten every step, the 1-px border stays
        # zero for the kernel's lifetime (this *is* the conv padding — no HBM pad).
        pad_ref[...] = jnp.zeros_like(pad_ref)
        sum_ref[...] = jnp.zeros_like(sum_ref)
        ssq_ref[...] = jnp.zeros_like(ssq_ref)

    # Write this image into the interior of the zero-bordered scratch.
    pad_ref[1:h + 1, 1:w + 1, :] = h_ref[...].astype(jnp.float32)

    # im2col: 9 shifted (H, W, C) views -> one (H*W, 9C) slab, so the 3x3 conv is a
    # single big-K MXU matmul instead of 9 tiny-K ones with per-tap relayouts.
    for k in range(9):
        dy, dx = divmod(k, 3)
        patch = pad_ref[dy:dy + h, dx:dx + w, :].reshape(m, c)
        slab_ref[:, k * c:(k + 1) * c] = patch.astype(slab_ref.dtype)

    y = jnp.dot(slab_ref[...], w_ref[...], preferred_element_type=jnp.float32)

    @pl.when(phase == 0)
    def _accumulate():
        sum_ref[...] += jnp.sum(y, axis=0, keepdims=True)
        ssq_ref[...] += jnp.sum(y * y, axis=0, keepdims=True)
        o_ref[...] = y.reshape(h, w, c)           # placeholder; overwritten in phase 1

    @pl.when(jnp.logical_and(phase == 0, img == last_img))
    def _finalize_stats():
        inv_cnt = 1.0 / float(n * h * w)
        mean = sum_ref[...] * inv_cnt
        var = ssq_ref[...] * inv_cnt - mean * mean
        sum_ref[...] = mean
        ssq_ref[...] = jax.lax.rsqrt(var + EPS)

    @pl.when(phase == 1)
    def _normalize():
        yn = (y - sum_ref[...]) * ssq_ref[...]
        out = jnp.maximum(yn * g_ref[...] + b_ref[...], 0.0)
        o_ref[...] = out.reshape(h, w, c)


# --------------------------------------------------------------------------
# Wrapper
# --------------------------------------------------------------------------
def simple_conv_neck(x_nchw, w1, w2_hwio, gamma, beta, *, row_tile_cap=256):
    """Pallas forward. x_nchw: (N, Cin, H, W); returns (N, Cout, H, W) f32."""
    n, cin, h, w = x_nchw.shape
    cout = w1.shape[1]
    cpad = _round_up(cout, 128)          # lane-dense channel axis
    m = n * h * w
    tile_m = _pick_row_tile(m, row_tile_cap)
    n_tiles = m // tile_m

    # NHWC with channels on lanes; bf16 matmul operands (f32 accumulation in-kernel).
    x2d = jnp.transpose(x_nchw, (0, 2, 3, 1)).reshape(m, cin).astype(jnp.bfloat16)
    w1p = jnp.zeros((cin, cpad), jnp.bfloat16).at[:, :cout].set(w1.astype(jnp.bfloat16))
    # gamma/beta zero-padded -> padded channels stay exactly 0 through BN+ReLU.
    g2d = jnp.zeros((1, cpad), jnp.float32).at[0, :cout].set(gamma.astype(jnp.float32))
    b2d = jnp.zeros((1, cpad), jnp.float32).at[0, :cout].set(beta.astype(jnp.float32))
    # 3x3 weights as one im2col matrix: rows ordered (tap k, input channel).
    w2p = jnp.zeros((3, 3, cpad, cpad), jnp.bfloat16)
    w2p = w2p.at[:, :, :cout, :cout].set(w2_hwio.astype(jnp.bfloat16))
    w2_flat = w2p.reshape(9 * cpad, cpad)

    cparams = pltpu.CompilerParams(
        # Phase ordering + shared global-stat scratch force sequential execution.
        dimension_semantics=("arbitrary", "arbitrary"),
        # Above the 32 MiB default scoped limit, below v7x's 64 MiB physical VMEM.
        vmem_limit_bytes=48 * 1024 * 1024,
    )

    # --- stage 1: 1x1 conv + BN + ReLU (two-phase row-tiled grid) ---
    h1 = pl.pallas_call(
        functools.partial(conv1_bn_relu_kernel, m_total=float(m)),
        out_shape=jax.ShapeDtypeStruct((m, cpad), jnp.bfloat16),
        grid=(2, n_tiles),
        in_specs=[
            pl.BlockSpec((tile_m, cin), lambda p, t: (t, 0)),
            pl.BlockSpec((cin, cpad), lambda p, t: (0, 0)),
            pl.BlockSpec((1, cpad), lambda p, t: (0, 0)),
            pl.BlockSpec((1, cpad), lambda p, t: (0, 0)),
        ],
        out_specs=pl.BlockSpec((tile_m, cpad), lambda p, t: (t, 0)),
        scratch_shapes=[pltpu.VMEM((1, cpad), jnp.float32),   # sum  -> mean
                        pltpu.VMEM((1, cpad), jnp.float32)],  # ssq  -> inv_std
        compiler_params=cparams,
    )(x2d, w1p, g2d, b2d)

    # Free row-major reshape (no HBM-level pad/transpose between the stages).
    h1_nhwc = h1.reshape(n, h, w, cpad)

    # --- stage 2: 3x3 conv + BN + ReLU (two-phase per-image grid, halo in VMEM) ---
    out_nhwc = pl.pallas_call(
        functools.partial(conv3_bn_relu_kernel, n=n, h=h, w=w, c=cpad),
        out_shape=jax.ShapeDtypeStruct((n, h, w, cpad), jnp.float32),
        grid=(2, n),
        in_specs=[
            pl.BlockSpec((None, h, w, cpad), lambda p, i: (i, 0, 0, 0)),
            pl.BlockSpec((9 * cpad, cpad), lambda p, i: (0, 0)),
            pl.BlockSpec((1, cpad), lambda p, i: (0, 0)),
            pl.BlockSpec((1, cpad), lambda p, i: (0, 0)),
        ],
        out_specs=pl.BlockSpec((None, h, w, cpad), lambda p, i: (i, 0, 0, 0)),
        scratch_shapes=[
            pltpu.VMEM((h + 2, w + 2, cpad), jnp.float32),    # zero-bordered halo image
            pltpu.VMEM((h * w, 9 * cpad), jnp.bfloat16),      # im2col slab
            pltpu.VMEM((1, cpad), jnp.float32),               # sum  -> mean
            pltpu.VMEM((1, cpad), jnp.float32),               # ssq  -> inv_std
        ],
        compiler_params=cparams,
    )(h1_nhwc, w2_flat, g2d, b2d)

    # Strip lane padding and return NCHW to honor the PyTorch module contract.
    # (A fused consumer could take the lane-dense NHWC slab directly.)
    out = out_nhwc[..., :cout]
    return jnp.transpose(out, (0, 3, 1, 2))


# --------------------------------------------------------------------------
# Pure-JAX reference mirroring the kernel's precision policy (bf16 matmul
# operands / bf16 inter-stage tensor, f32 accumulation and BN math).
# --------------------------------------------------------------------------
def reference(x_nchw, w1, w2_hwio, gamma, beta):
    x = jnp.transpose(x_nchw, (0, 2, 3, 1)).astype(jnp.bfloat16)

    def bn_relu(y):  # training-mode BN: batch stats, biased variance, eps=1e-5
        mean = y.mean(axis=(0, 1, 2))
        var = jnp.square(y - mean).mean(axis=(0, 1, 2))
        return jnp.maximum((y - mean) * jax.lax.rsqrt(var + EPS) * gamma + beta, 0.0)

    y = jnp.einsum("nhwc,cd->nhwd", x, w1.astype(jnp.bfloat16),
                   preferred_element_type=jnp.float32)
    y = bn_relu(y).astype(jnp.bfloat16)
    y = jax.lax.conv_general_dilated(
        y, w2_hwio.astype(jnp.bfloat16), (1, 1), "SAME",
        dimension_numbers=("NHWC", "HWIO", "NHWC"),
        preferred_element_type=jnp.float32)
    y = bn_relu(y)
    return jnp.transpose(y, (0, 3, 1, 2))


if __name__ == "__main__":
    N, CIN, COUT, H, W = 2, 4, 8, 16, 16

    key = jax.random.PRNGKey(0)
    kx, k1, k2, kg, kb = jax.random.split(key, 5)
    x = jax.random.normal(kx, (N, CIN, H, W), jnp.float32)
    # conv1.weight in PyTorch is (COUT, CIN, 1, 1); stored here as (CIN, COUT)
    w1 = 0.1 * jax.random.normal(k1, (CIN, COUT), jnp.float32)
    # conv2.weight in PyTorch is (COUT, COUT, 3, 3); stored here as HWIO (3, 3, CIN=COUT, COUT)
    w2 = 0.1 * jax.random.normal(k2, (3, 3, COUT, COUT), jnp.float32)
    gamma = 1.0 + 0.1 * jax.random.normal(kg, (COUT,), jnp.float32)
    beta = 0.1 * jax.random.normal(kb, (COUT,), jnp.float32)

    out = jax.block_until_ready(simple_conv_neck(x, w1, w2, gamma, beta))
    ref = reference(x, w1, w2, gamma, beta)

    assert out.shape == (N, COUT, H, W), out.shape
    max_err = float(jnp.max(jnp.abs(out - ref)))
    assert jnp.allclose(out, ref, atol=1e-2, rtol=1e-2), max_err
    print("KERNEL_OK")
</pallas_src>

<mosaic_0001>
module attributes {stable_mosaic.version = 11 : i64} {
  func.func @conv1_bn_relu_kernel(%arg0: i32, %arg1: i32, %arg2: memref<256x4xbf16, #tpu.memory_space<vmem>>, %arg3: memref<4x128xbf16, #tpu.memory_space<vmem>>, %arg4: memref<1x128xf32, #tpu.memory_space<vmem>>, %arg5: memref<1x128xf32, #tpu.memory_space<vmem>>, %arg6: memref<256x128xbf16, #tpu.memory_space<vmem>>, %arg7: memref<1x128xf32, #tpu.memory_space<vmem>>, %arg8: memref<1x128xf32, #tpu.memory_space<vmem>>) attributes {dimension_semantics = [#tpu.dimension_semantics<arbitrary>, #tpu.dimension_semantics<arbitrary>], iteration_bounds = array<i64: 2, 2>, scalar_prefetch = 0 : i64, scratch_operands = 2 : i64, tpu.core_type = #tpu.core_type<tc>, window_params = [{transform_indices = @transform_0, window_bounds = array<i64: 256, 4>}, {pipeline_mode = #tpu.pipeline_mode<synchronous>, transform_indices = @transform_1, window_bounds = array<i64: 4, 128>}, {pipeline_mode = #tpu.pipeline_mode<synchronous>, transform_indices = @transform_2, window_bounds = array<i64: 1, 128>}, {pipeline_mode = #tpu.pipeline_mode<synchronous>, transform_indices = @transform_3, window_bounds = array<i64: 1, 128>}, {transform_indices = @transform_4, window_bounds = array<i64: 256, 128>}]} {
    %c0_i32 = arith.constant 0 : i32
    %0 = arith.cmpi eq, %arg0, %c0_i32 : i32
    %c0_i32_0 = arith.constant 0 : i32
    %1 = arith.cmpi eq, %arg1, %c0_i32_0 : i32
    %2 = arith.andi %0, %1 : i1
    %3 = arith.extui %2 : i1 to i32
    %c0_i32_1 = arith.constant 0 : i32
    %4 = arith.cmpi ne, %3, %c0_i32_1 : i32
    scf.if %4 {
      %cst_11 = arith.constant 0.000000e+00 : f32
      %19 = vector.broadcast %cst_11 : f32 to vector<1x128xf32>
      %c0_12 = arith.constant 0 : index
      %c0_13 = arith.constant 0 : index
      %20 = vector.load %arg7[%c0_12, %c0_13] : memref<1x128xf32, #tpu.memory_space<vmem>>, vector<1x128xf32>
      tpu.vector_store %arg7[%c0_12, %c0_13], %19 {strides = array<i32>} : memref<1x128xf32, #tpu.memory_space<vmem>>, vector<1x128xf32>,
      %cst_14 = arith.constant 0.000000e+00 : f32
      %21 = vector.broadcast %cst_14 : f32 to vector<1x128xf32>
      %c0_15 = arith.constant 0 : index
      %c0_16 = arith.constant 0 : index
      %22 = vector.load %arg8[%c0_15, %c0_16] : memref<1x128xf32, #tpu.memory_space<vmem>>, vector<1x128xf32>
      tpu.vector_store %arg8[%c0_15, %c0_16], %21 {strides = array<i32>} : memref<1x128xf32, #tpu.memory_space<vmem>>, vector<1x128xf32>,
    } else {
    }
    %c0 = arith.constant 0 : index
    %c0_2 = arith.constant 0 : index
    %5 = vector.load %arg2[%c0, %c0_2] : memref<256x4xbf16, #tpu.memory_space<vmem>>, vector<256x4xbf16>
    %c0_3 = arith.constant 0 : index
    %c0_4 = arith.constant 0 : index
    %6 = vector.load %arg3[%c0_3, %c0_4] : memref<4x128xbf16, #tpu.memory_space<vmem>>, vector<4x128xbf16>
    %cst = arith.constant dense<0.000000e+00> : vector<256x128xf32>
    %7 = tpu.matmul %5, %6, %cst {dimension_numbers = #tpu.dot_dimension_numbers<[1], [0], [0], [1], [0, 0, 1, 1], [], []>} : vector<256x4xbf16>, vector<4x128xbf16>, vector<256x128xf32> -> vector<256x128xf32>
    %c0_i32_5 = arith.constant 0 : i32
    %8 = arith.cmpi eq, %arg0, %c0_i32_5 : i32
    %9 = arith.extui %8 : i1 to i32
    %c0_i32_6 = arith.constant 0 : i32
    %10 = arith.cmpi ne, %9, %c0_i32_6 : i32
    scf.if %10 {
      %c0_11 = arith.constant 0 : index
      %c0_12 = arith.constant 0 : index
      %19 = vector.load %arg7[%c0_11, %c0_12] : memref<1x128xf32, #tpu.memory_space<vmem>>, vector<1x128xf32>
      %cst_13 = arith.constant dense<0.000000e+00> : vector<128xf32>
      %20 = vector.multi_reduction <add>, %7, %cst_13 [0] : vector<256x128xf32> to vector<128xf32>
      %21 = vector.shape_cast %20 : vector<128xf32> to vector<1x128xf32>
      %22 = arith.addf %19, %21 : vector<1x128xf32>
      %c0_14 = arith.constant 0 : index
      %c0_15 = arith.constant 0 : index
      %23 = vector.load %arg7[%c0_14, %c0_15] : memref<1x128xf32, #tpu.memory_space<vmem>>, vector<1x128xf32>
      tpu.vector_store %arg7[%c0_14, %c0_15], %22 {strides = array<i32>} : memref<1x128xf32, #tpu.memory_space<vmem>>, vector<1x128xf32>,
      %c0_16 = arith.constant 0 : index
      %c0_17 = arith.constant 0 : index
      %24 = vector.load %arg8[%c0_16, %c0_17] : memref<1x128xf32, #tpu.memory_space<vmem>>, vector<1x128xf32>
      %25 = arith.mulf %7, %7 : vector<256x128xf32>
      %cst_18 = arith.constant dense<0.000000e+00> : vector<128xf32>
      %26 = vector.multi_reduction <add>, %25, %cst_18 [0] : vector<256x128xf32> to vector<128xf32>
      %27 = vector.shape_cast %26 : vector<128xf32> to vector<1x128xf32>
      %28 = arith.addf %24, %27 : vector<1x128xf32>
      %c0_19 = arith.constant 0 : index
      %c0_20 = arith.constant 0 : index
      %29 = vector.load %arg8[%c0_19, %c0_20] : memref<1x128xf32, #tpu.memory_space<vmem>>, vector<1x128xf32>
      tpu.vector_store %arg8[%c0_19, %c0_20], %28 {strides = array<i32>} : memref<1x128xf32, #tpu.memory_space<vmem>>, vector<1x128xf32>,
      %30 = arith.truncf %7 : vector<256x128xf32> to vector<256x128xbf16>
      %c0_21 = arith.constant 0 : index
      %c0_22 = arith.constant 0 : index
      %31 = vector.load %arg6[%c0_21, %c0_22] : memref<256x128xbf16, #tpu.memory_space<vmem>>, vector<256x128xbf16>
      tpu.vector_store %arg6[%c0_21, %c0_22], %30 {strides = array<i32>} : memref<256x128xbf16, #tpu.memory_space<vmem>>, vector<256x128xbf16>,
    } else {
    }
    %c0_i32_7 = arith.constant 0 : i32
    %11 = arith.cmpi eq, %arg0, %c0_i32_7 : i32
    %c1_i32 = arith.constant 1 : i32
    %12 = arith.cmpi eq, %arg1, %c1_i32 : i32
    %13 = arith.andi %11, %12 : i1
    %14 = arith.extui %13 : i1 to i32
    %c0_i32_8 = arith.constant 0 : i32
    %15 = arith.cmpi ne, %14, %c0_i32_8 : i32
    scf.if %15 {
      %c0_11 = arith.constant 0 : index
      %c0_12 = arith.constant 0 : index
      %19 = vector.load %arg7[%c0_11, %c0_12] : memref<1x128xf32, #tpu.memory_space<vmem>>, vector<1x128xf32>
      %cst_13 = arith.constant 0.001953125 : f32
      %20 = vector.broadcast %cst_13 : f32 to vector<1x128xf32>
      %21 = arith.mulf %19, %20 : vector<1x128xf32>
      %c0_14 = arith.constant 0 : index
      %c0_15 = arith.constant 0 : index
      %22 = vector.load %arg8[%c0_14, %c0_15] : memref<1x128xf32, #tpu.memory_space<vmem>>, vector<1x128xf32>
      %cst_16 = arith.constant 0.001953125 : f32
      %23 = vector.broadcast %cst_16 : f32 to vector<1x128xf32>
      %24 = arith.mulf %22, %23 : vector<1x128xf32>
      %25 = arith.mulf %21, %21 : vector<1x128xf32>
      %26 = arith.subf %24, %25 : vector<1x128xf32>
      %c0_17 = arith.constant 0 : index
      %c0_18 = arith.constant 0 : index
      %27 = vector.load %arg7[%c0_17, %c0_18] : memref<1x128xf32, #tpu.memory_space<vmem>>, vector<1x128xf32>
      tpu.vector_store %arg7[%c0_17, %c0_18], %21 {strides = array<i32>} : memref<1x128xf32, #tpu.memory_space<vmem>>, vector<1x128xf32>,
      %cst_19 = arith.constant 9.99999974E-6 : f32
      %28 = vector.broadcast %cst_19 : f32 to vector<1x128xf32>
      %29 = arith.addf %26, %28 : vector<1x128xf32>
      %30 = math.rsqrt %29 : vector<1x128xf32>
      %c0_20 = arith.constant 0 : index
      %c0_21 = arith.constant 0 : index
      %31 = vector.load %arg8[%c0_20, %c0_21] : memref<1x128xf32, #tpu.memory_space<vmem>>, vector<1x128xf32>
      tpu.vector_store %arg8[%c0_20, %c0_21], %30 {strides = array<i32>} : memref<1x128xf32, #tpu.memory_space<vmem>>, vector<1x128xf32>,
    } else {
    }
    %c1_i32_9 = arith.constant 1 : i32
    %16 = arith.cmpi eq, %arg0, %c1_i32_9 : i32
    %17 = arith.extui %16 : i1 to i32
    %c0_i32_10 = arith.constant 0 : i32
    %18 = arith.cmpi ne, %17, %c0_i32_10 : i32
    scf.if %18 {
      %c0_11 = arith.constant 0 : index
      %c0_12 = arith.constant 0 : index
      %19 = vector.load %arg7[%c0_11, %c0_12] : memref<1x128xf32, #tpu.memory_space<vmem>>, vector<1x128xf32>
      %20 = vector.broadcast %19 : vector<1x128xf32> to vector<256x128xf32>
      %21 = arith.subf %7, %20 : vector<256x128xf32>
      %c0_13 = arith.constant 0 : index
      %c0_14 = arith.constant 0 : index
      %22 = vector.load %arg8[%c0_13, %c0_14] : memref<1x128xf32, #tpu.memory_space<vmem>>, vector<1x128xf32>
      %23 = vector.broadcast %22 : vector<1x128xf32> to vector<256x128xf32>
      %24 = arith.mulf %21, %23 : vector<256x128xf32>
      %c0_15 = arith.constant 0 : index
      %c0_16 = arith.constant 0 : index
      %25 = vector.load %arg4[%c0_15, %c0_16] : memref<1x128xf32, #tpu.memory_space<vmem>>, vector<1x128xf32>
      %26 = vector.broadcast %25 : vector<1x128xf32> to vector<256x128xf32>
      %27 = arith.mulf %24, %26 : vector<256x128xf32>
      %c0_17 = arith.constant 0 : index
      %c0_18 = arith.constant 0 : index
      %28 = vector.load %arg5[%c0_17, %c0_18] : memref<1x128xf32, #tpu.memory_space<vmem>>, vector<1x128xf32>
      %29 = vector.broadcast %28 : vector<1x128xf32> to vector<256x128xf32>
      %30 = arith.addf %27, %29 : vector<256x128xf32>
      %cst_19 = arith.constant 0.000000e+00 : f32
      %31 = vector.broadcast %cst_19 : f32 to vector<256x128xf32>
      %32 = arith.maximumf %30, %31 : vector<256x128xf32>
      %33 = arith.truncf %32 : vector<256x128xf32> to vector<256x128xbf16>
      %c0_20 = arith.constant 0 : index
      %c0_21 = arith.constant 0 : index
      %34 = vector.load %arg6[%c0_20, %c0_21] : memref<256x128xbf16, #tpu.memory_space<vmem>>, vector<256x128xbf16>
      tpu.vector_store %arg6[%c0_20, %c0_21], %33 {strides = array<i32>} : memref<256x128xbf16, #tpu.memory_space<vmem>>, vector<256x128xbf16>,
    } else {
    }
    return
  }
  func.func @transform_0(%arg0: i32, %arg1: i32) -> (i32, i32) {
    %c0_i32 = arith.constant 0 : i32
    %c0_i32_0 = arith.constant 0 : i32
    return %arg1, %c0_i32 : i32, i32
  }
  func.func @transform_1(%arg0: i32, %arg1: i32) -> (i32, i32) {
    %c0_i32 = arith.constant 0 : i32
    %c0_i32_0 = arith.constant 0 : i32
    %c0_i32_1 = arith.constant 0 : i32
    return %c0_i32, %c0_i32_0 : i32, i32
  }
  func.func @transform_2(%arg0: i32, %arg1: i32) -> (i32, i32) {
    %c0_i32 = arith.constant 0 : i32
    %c0_i32_0 = arith.constant 0 : i32
    %c0_i32_1 = arith.constant 0 : i32
    return %c0_i32, %c0_i32_0 : i32, i32
  }
  func.func @transform_3(%arg0: i32, %arg1: i32) -> (i32, i32) {
    %c0_i32 = arith.constant 0 : i32
    %c0_i32_0 = arith.constant 0 : i32
    %c0_i32_1 = arith.constant 0 : i32
    return %c0_i32, %c0_i32_0 : i32, i32
  }
  func.func @transform_4(%arg0: i32, %arg1: i32) -> (i32, i32) {
    %c0_i32 = arith.constant 0 : i32
    %c0_i32_0 = arith.constant 0 : i32
    return %arg1, %c0_i32 : i32, i32
  }
}

</mosaic_0001>

<llo_original>
// kernel: tpu_custom_call.1
$region0: #{tpu_custom_call.1}
  #allocation0 [shape = 'u32[]', space=smem, size = 0x4, offset = 0x4, fixed_abs, tag = 'smem constant byte address 0x4 - core index']
  #allocation1 [shape = 'u32[72,128]{1,0:T(1,128)}', space=vmem, size = 0x9000, scoped, tag = 'internal scratch']
  #allocation2 [shape = 'f32[1,128]{1,0:T(1,128)}', space=vmem, size = 0x200, scoped, tag = 'scratch operand']
  #allocation3 [shape = 'f32[1,128]{1,0:T(1,128)}', space=vmem, size = 0x200, scoped, tag = 'scratch operand']
  %s0 = inlined_call_operand.vmem [shape: bf16[512,4], index: 0, kind: input, shape index: {}]
  %s1 = inlined_call_operand.vmem [shape: bf16[4,128], index: 1, kind: input, shape index: {}]
  %s2 = inlined_call_operand.vmem [shape: f32[1,128], index: 2, kind: input, shape index: {}]
  %s3 = inlined_call_operand.vmem [shape: f32[1,128], index: 3, kind: input, shape index: {}]
  %s4 = inlined_call_operand.hbm [shape: bf16[512,128], index: 4, kind: output, shape index: {}]
  %s5 = sld [smem:[#allocation0]]
  $region65: #{tpu_custom_call.1} parent=0
    _
  %s7 = ssub.s32 1, %s5
  %s8 = scalar_select 0, %s7, %s5
  $region1: #{tpu_custom_call.1} parent=0
    #allocation4 [shape = 'u8[131072]{0}', space=vmem, size = 0x20000, scoped, tag = 'output window, operand 0']
    #allocation5 [shape = 's32[2]{0}', space=sflag, size = 0x8, scoped, tag = 'scoped memory for tpu_custom_call.1']
    %9 = vsyncpa [#allocation5], 0
    %s10 = scalar_lea.sflag [#allocation5], 1
    %11 = vsyncpa %s10, 0
    loop: start=0, step=1, limit=6
    $region2: #{tpu_custom_call.1} parent=1 // loop_pre_header
      _
    $region3: #{tpu_custom_call.1} parent=1 // loop_header
      %s13 = sphi 0, %s17
      %p14 = scmp.ge.s32.totalorder %s13, 6
      %s20 = sphi 0, %s32
      %s21 = sphi 0, %s28
      %s22 = sphi 0, %s20
      %s23 = sphi 0, %s21
      %s24 = sphi 0, %s22
      %s25 = sphi 0, %s23
      %s35 = sphi 0, %s37
      %s38 = sphi 0, %s35
      %s39 = sphi 0, %s38
      %s55 = sphi 0, %s39
      %s59 = sphi 0, %s59
      %s61 = sphi 0, %s59
      %s62 = sphi 0, %s61
      %s76 = sphi 0, %s62
      %s80 = sphi 0, %s80
      %s82 = sphi 0, %s80
      %s83 = sphi 0, %s82
      %s97 = sphi 0, %s83
      %s101 = sphi 0, %s101
      %s103 = sphi 0, %s101
      %s104 = sphi 0, %s103
      %s118 = sphi 0, %s104
      %s124 = sphi 0, %s126
      %s127 = sphi 0, %s124
      %s128 = sphi 0, %s127
      %s144 = sphi 0, %s128
    $region4: #{tpu_custom_call.1} parent=1 // loop_header_branch
      %16 = sbr.rel (%p14) target = $region8
    $region5: #{tpu_custom_call.1} parent=1 // loop_body
      %s18 = ssub.s32 %s13, 1
      %s19 = ssub.s32 %s13, 2
      %s26 = sadd.s32 1, %s21
      %p27 = scmp.ge.s32.totalorder %s26, 2
      %s28 = scalar_select %p27, 0, %s26
      %s29 = sadd.s32 1, %s20
      %s30 = scalar_select %p27, %s29, %s20
      %p31 = scmp.ge.s32.totalorder %s30, 2
      %s32 = scalar_select %p31, 0, %s30
      %s33 = ssub.s32 %s21, %s28
      %p34 = scmp.eq.s32.totalorder %s33, 0
      %s36 = sadd.s32 %s35, 1
      %s37 = scalar_select %p34, %s35, %s36
      %p40 = pneg %p34
      %p41 = scmp.eq.s32.totalorder %s13, 3
      %p42 = por %p40, %p41
      %p43 = scmp.ne.s32.totalorder %s35, %s38
      %p44 = scmp.eq.s32.totalorder %s13, 0
      %p45 = por %p43, %p44
      %p46 = scmp.ne.s32.totalorder %s35, %s38
      %p47 = scmp.eq.s32.totalorder %s18, 3
      %p48 = por %p46, %p47
      %p49 = scmp.ne.s32.totalorder %s38, %s39
      %p50 = scmp.eq.s32.totalorder %s18, 0
      %p51 = por %p49, %p50
      %p52 = scmp.ne.s32.totalorder %s38, %s39
      %p53 = scmp.eq.s32.totalorder %s19, 3
      %p54 = por %p52, %p53
      %p56 = scmp.ne.s32.totalorder %s39, %s55
      %p57 = scmp.eq.s32.totalorder %s19, 0
      %p58 = por %p56, %p57
      %s60 = sadd.s32 %s59, 1
      %p63 = scmp.eq.s32.totalorder %s13, 3
      %p64 = scmp.ne.s32.totalorder %s59, %s61
      %p65 = scmp.eq.s32.totalorder %s13, 0
      %p66 = por %p64, %p65
      %p67 = scmp.ne.s32.totalorder %s59, %s61
      %p68 = scmp.eq.s32.totalorder %s18, 3
      %p69 = por %p67, %p68
      %p70 = scmp.ne.s32.totalorder %s61, %s62
      %p71 = scmp.eq.s32.totalorder %s18, 0
      %p72 = por %p70, %p71
      %p73 = scmp.ne.s32.totalorder %s61, %s62
      %p74 = scmp.eq.s32.totalorder %s19, 3
      %p75 = por %p73, %p74
      %p77 = scmp.ne.s32.totalorder %s62, %s76
      %p78 = scmp.eq.s32.totalorder %s19, 0
      %p79 = por %p77, %p78
      %s81 = sadd.s32 %s80, 1
      %p84 = scmp.eq.s32.totalorder %s13, 3
      %p85 = scmp.ne.s32.totalorder %s80, %s82
      %p86 = scmp.eq.s32.totalorder %s13, 0
      %p87 = por %p85, %p86
      %p88 = scmp.ne.s32.totalorder %s80, %s82
      %p89 = scmp.eq.s32.totalorder %s18, 3
      %p90 = por %p88, %p89
      %p91 = scmp.ne.s32.totalorder %s82, %s83
      %p92 = scmp.eq.s32.totalorder %s18, 0
      %p93 = por %p91, %p92
      %p94 = scmp.ne.s32.totalorder %s82, %s83
      %p95 = scmp.eq.s32.totalorder %s19, 3
      %p96 = por %p94, %p95
      %p98 = scmp.ne.s32.totalorder %s83, %s97
      %p99 = scmp.eq.s32.totalorder %s19, 0
      %p100 = por %p98, %p99
      %s102 = sadd.s32 %s101, 1
      %p105 = scmp.eq.s32.totalorder %s13, 3
      %p106 = scmp.ne.s32.totalorder %s101, %s103
      %p107 = scmp.eq.s32.totalorder %s13, 0
      %p108 = por %p106, %p107
      %p109 = scmp.ne.s32.totalorder %s101, %s103
      %p110 = scmp.eq.s32.totalorder %s18, 3
      %p111 = por %p109, %p110
      %p112 = scmp.ne.s32.totalorder %s103, %s104
      %p113 = scmp.eq.s32.totalorder %s18, 0
      %p114 = por %p112, %p113
      %p115 = scmp.ne.s32.totalorder %s103, %s104
      %p116 = scmp.eq.s32.totalorder %s19, 3
      %p117 = por %p115, %p116
      %p119 = scmp.ne.s32.totalorder %s104, %s118
      %p120 = scmp.eq.s32.totalorder %s19, 0
      %p121 = por %p119, %p120
      %s122 = ssub.s32 %s21, %s28
      %p123 = scmp.eq.s32.totalorder %s122, 0
      %s125 = sadd.s32 %s124, 1
      %s126 = scalar_select %p123, %s124, %s125
      %p129 = pneg %p123
      %p130 = scmp.eq.s32.totalorder %s13, 3
      %p131 = por %p129, %p130
      %p132 = scmp.ne.s32.totalorder %s124, %s127
      %p133 = scmp.eq.s32.totalorder %s13, 0
      %p134 = por %p132, %p133
      %p135 = scmp.ne.s32.totalorder %s124, %s127
      %p136 = scmp.eq.s32.totalorder %s18, 3
      %p137 = por %p135, %p136
      %p138 = scmp.ne.s32.totalorder %s127, %s128
      %p139 = scmp.eq.s32.totalorder %s18, 0
      %p140 = por %p138, %p139
      %p141 = scmp.ne.s32.totalorder %s127, %s128
      %p142 = scmp.eq.s32.totalorder %s19, 3
      %p143 = por %p141, %p142
      %p145 = scmp.ne.s32.totalorder %s128, %s144
      %p146 = scmp.eq.s32.totalorder %s19, 0
      %p147 = por %p145, %p146
      %p148 = scmp.le.s32.totalorder 1, %s13
      %p149 = scmp.lt.s32.totalorder %s13, 5
      %p150 = pnand %p148, %p149
      %p151 = pneg %p150
      // Predicated region
      $region9: #{tpu_custom_call.1} parent=5 // pred_check
        _
      $region10: #{tpu_custom_call.1} parent=5 // pred_check_branch
        %153 = sbr.rel (%p150) target = $region12
      $region11: #{tpu_custom_call.1} parent=5 // pred_region
        %s154 = ssub.s32 %s13, 1
        // Predicated region
        $region13: #{tpu_custom_call.1} parent=11 // pred_check
          %p155 = pneg %p72
        $region14: #{tpu_custom_call.1} parent=11 // pred_check_branch
          %157 = sbr.rel (%p155) target = $region16
        $region15: #{tpu_custom_call.1} parent=11 // pred_region
          _
        $region16: #{tpu_custom_call.1} parent=11 // pred_fallthru
          _
        // Predicated region
        $region17: #{tpu_custom_call.1} parent=11 // pred_check
          %p158 = pneg %p93
        $region18: #{tpu_custom_call.1} parent=11 // pred_check_branch
          %160 = sbr.rel (%p158) target = $region20
        $region19: #{tpu_custom_call.1} parent=11 // pred_region
          _
        $region20: #{tpu_custom_call.1} parent=11 // pred_fallthru
          _
        // Predicated region
        $region21: #{tpu_custom_call.1} parent=11 // pred_check
          %p161 = pneg %p114
        $region22: #{tpu_custom_call.1} parent=11 // pred_check_branch
          %163 = sbr.rel (%p161) target = $region24
        $region23: #{tpu_custom_call.1} parent=11 // pred_region
          _
        $region24: #{tpu_custom_call.1} parent=11 // pred_fallthru
          _
      $region12: #{tpu_custom_call.1} parent=5 // pred_fallthru
        _
      %p164 = scmp.lt.s32.totalorder %s13, 4
      // Predicated region
      $region25: #{tpu_custom_call.1} parent=5 // pred_check
        %p165 = pneg %p164
      $region26: #{tpu_custom_call.1} parent=5 // pred_check_branch
        %167 = sbr.rel (%p165) target = $region28
      $region27: #{tpu_custom_call.1} parent=5 // pred_region
        // Predicated region
        $region29: #{tpu_custom_call.1} parent=27 // pred_check
          %p168 = pneg %p45
        $region30: #{tpu_custom_call.1} parent=27 // pred_check_branch
          %170 = sbr.rel (%p168) target = $region32
        $region31: #{tpu_custom_call.1} parent=27 // pred_region
          %s171 = smul.u32 32, %s21
          %p172 = scmp.lt.s32.totalorder %s171, 63
          %s173 = scalar_select %p172, %s171, 63
          %s174 = smul.addr %s173, 4
          %s175 = scalar_lea.vmem %s0, %s174
          %s176 = smul.u32 32, %s21
        $region32: #{tpu_custom_call.1} parent=27 // pred_fallthru
          _
      $region28: #{tpu_custom_call.1} parent=5 // pred_fallthru
        _
      %p177 = scmp.le.s32.totalorder 1, %s13
      %p178 = scmp.lt.s32.totalorder %s13, 5
      %p179 = pnand %p177, %p178
      %p180 = pneg %p179
      // Predicated region
      $region33: #{tpu_custom_call.1} parent=5 // pred_check
        _
      $region34: #{tpu_custom_call.1} parent=5 // pred_check_branch
        %182 = sbr.rel (%p179) target = $region36
      $region35: #{tpu_custom_call.1} parent=5 // pred_region
        %s183 = ssub.s32 %s13, 1
        %s184 = smul.u32 32, %s23
        %p185 = scmp.lt.s32.totalorder %s184, 63
        %s186 = scalar_select %p185, %s184, 63
        %s187 = smul.addr %s186, 4
        %s188 = scalar_lea.vmem %s0, %s187
        %p189 = pneg %p51
        %p190 = pneg %p48
        %p191 = pneg %p72
        %p192 = pneg %p69
        %p193 = pneg %p93
        %p194 = pneg %p90
        %p195 = pneg %p114
        %p196 = pneg %p111
        %p197 = pneg %p140
        %p198 = pneg %p137
        %s199 = sand.u32 %s127, 1
        %s200 = scalar_lea.sflag [#allocation5], %s199
        %s201 = sand.u32 %s127, 1
        %s202 = smul.addr %s201, 128
        %s203 = scalar_lea.vmem [#allocation4], %s202
        %s204 = smul.u32 32, %s23
        %p205 = scmp.lt.s32.totalorder %s204, 63
        %s206 = scalar_select %p205, %s204, 63
        %s207 = smul.addr %s206, 4
        %s208 = scalar_lea.vmem %s0, %s207
        %s209 = smul.u32 32, %s23
        %s210 = smul.u32 32, %s23
        %p212 = scmp.eq.s32.totalorder %s22, 0
        %p213 = scmp.eq.s32.totalorder %s23, 0
        %p214 = pnand %p212, %p213
        %p215 = pneg %p214
        // Predicated region
        $region37: #{tpu_custom_call.1} parent=35 // pred_check
          _
        $region38: #{tpu_custom_call.1} parent=35 // pred_check_branch
          %217 = sbr.rel (%p214) target = $region40
        $region39: #{tpu_custom_call.1} parent=35 // pred_region
          %218 = vst [vmem:[#allocation2] sm:$0x1] 0.0
          %219 = vst [vmem:[#allocation3] sm:$0x1] 0.0
        $region40: #{tpu_custom_call.1} parent=35 // pred_fallthru
          _
        %v220 = vld [vmem:[%s208] sm:$0xf]
        %v221 = vld [vmem:[%s208 + $0x4] sm:$0xf]
        %v222 = vld [vmem:[%s208 + $0x8] sm:$0xf]
        %v223 = vld [vmem:[%s208 + $0xc] sm:$0xf]
        %v224 = vld [vmem:[%s208 + $0x10] sm:$0xf]
        %v225 = vld [vmem:[%s208 + $0x14] sm:$0xf]
        %v226 = vld [vmem:[%s208 + $0x18] sm:$0xf]
        %v227 = vld [vmem:[%s208 + $0x1c] sm:$0xf]
        %v228 = vld [vmem:[%s208 + $0x20] sm:$0xf]
        %v229 = vld [vmem:[%s208 + $0x24] sm:$0xf]
        %v230 = vld [vmem:[%s208 + $0x28] sm:$0xf]
        %v231 = vld [vmem:[%s208 + $0x2c] sm:$0xf]
        %v232 = vld [vmem:[%s208 + $0x30] sm:$0xf]
        %v233 = vld [vmem:[%s208 + $0x34] sm:$0xf]
        %v234 = vld [vmem:[%s208 + $0x38] sm:$0xf]
        %v235 = vld [vmem:[%s208 + $0x3c] sm:$0xf]
        %v236 = vld [vmem:[%s208 + $0x40] sm:$0xf]
        %v237 = vld [vmem:[%s208 + $0x44] sm:$0xf]
        %v238 = vld [vmem:[%s208 + $0x48] sm:$0xf]
        %v239 = vld [vmem:[%s208 + $0x4c] sm:$0xf]
        %v240 = vld [vmem:[%s208 + $0x50] sm:$0xf]
        %v241 = vld [vmem:[%s208 + $0x54] sm:$0xf]
        %v242 = vld [vmem:[%s208 + $0x58] sm:$0xf]
        %v243 = vld [vmem:[%s208 + $0x5c] sm:$0xf]
        %v244 = vld [vmem:[%s208 + $0x60] sm:$0xf]
        %v245 = vld [vmem:[%s208 + $0x64] sm:$0xf]
        %v246 = vld [vmem:[%s208 + $0x68] sm:$0xf]
        %v247 = vld [vmem:[%s208 + $0x6c] sm:$0xf]
        %v248 = vld [vmem:[%s208 + $0x70] sm:$0xf]
        %v249 = vld [vmem:[%s208 + $0x74] sm:$0xf]
        %v250 = vld [vmem:[%s208 + $0x78] sm:$0xf]
        %v251 = vld [vmem:[%s208 + $0x7c] sm:$0xf]
        %v252 = vld [vmem:[%s1] sm:$0x3]
        %v285 = vunpack.c.l.b16 %v220
        %v286 = vunpack.c.l.b16 %v221
        %v287 = vunpack.c.l.b16 %v222
        %v288 = vunpack.c.l.b16 %v223
        %v289 = vunpack.c.l.b16 %v224
        %v290 = vunpack.c.l.b16 %v225
        %v291 = vunpack.c.l.b16 %v226
        %v292 = vunpack.c.l.b16 %v227
        %v293 = vunpack.c.l.b16 %v228
        %v294 = vunpack.c.l.b16 %v229
        %v295 = vunpack.c.l.b16 %v230
        %v296 = vunpack.c.l.b16 %v231
        %v297 = vunpack.c.l.b16 %v232
        %v298 = vunpack.c.l.b16 %v233
        %v299 = vunpack.c.l.b16 %v234
        %v300 = vunpack.c.l.b16 %v235
        %v301 = vunpack.c.l.b16 %v236
        %v302 = vunpack.c.l.b16 %v237
        %v303 = vunpack.c.l.b16 %v238
        %v304 = vunpack.c.l.b16 %v239
        %v305 = vunpack.c.l.b16 %v240
        %v306 = vunpack.c.l.b16 %v241
        %v307 = vunpack.c.l.b16 %v242
        %v308 = vunpack.c.l.b16 %v243
        %v309 = vunpack.c.l.b16 %v244
        %v310 = vunpack.c.l.b16 %v245
        %v311 = vunpack.c.l.b16 %v246
        %v312 = vunpack.c.l.b16 %v247
        %v313 = vunpack.c.l.b16 %v248
        %v314 = vunpack.c.l.b16 %v249
        %v315 = vunpack.c.l.b16 %v250
        %v316 = vunpack.c.l.b16 %v251
        %v317 = vpack.c.b16 %v286, %v285
        %v318 = vpack.c.b16 %v288, %v287
        %v319 = vpack.c.b16 %v290, %v289
        %v320 = vpack.c.b16 %v292, %v291
        %v321 = vpack.c.b16 %v294, %v293
        %v322 = vpack.c.b16 %v296, %v295
        %v323 = vpack.c.b16 %v298, %v297
        %v324 = vpack.c.b16 %v300, %v299
        %v325 = vpack.c.b16 %v302, %v301
        %v326 = vpack.c.b16 %v304, %v303
        %v327 = vpack.c.b16 %v306, %v305
        %v328 = vpack.c.b16 %v308, %v307
        %v329 = vpack.c.b16 %v310, %v309
        %v330 = vpack.c.b16 %v312, %v311
        %v331 = vpack.c.b16 %v314, %v313
        %v332 = vpack.c.b16 %v316, %v315
        %vm333 = vcmask 31744
        %v335 = vsel %vm333, %v317, 0
        %v338 = vsel %vm333, %v318, 0
        %v341 = vsel %vm333, %v319, 0
        %v344 = vsel %vm333, %v320, 0
        %v347 = vsel %vm333, %v321, 0
        %v350 = vsel %vm333, %v322, 0
        %v353 = vsel %vm333, %v323, 0
        %v356 = vsel %vm333, %v324, 0
        %v359 = vsel %vm333, %v325, 0
        %v362 = vsel %vm333, %v326, 0
        %v365 = vsel %vm333, %v327, 0
        %v368 = vsel %vm333, %v328, 0
        %v371 = vsel %vm333, %v329, 0
        %v374 = vsel %vm333, %v330, 0
        %v377 = vsel %vm333, %v331, 0
        %v380 = vsel %vm333, %v332, 0
        %vm382 = vcmask 1041408
        %v384 = vsel %vm382, %v252, 0
        %386 = vmatpush.bf16.msra.mxu0 0
        %387 = vmatpush.bf16.msra.mxu0 0
        %388 = vmatpush.bf16.msra.mxu0 0
        %389 = vmatpush.bf16.msra.mxu0 0
        %390 = vmatpush.bf16.msra.mxu0 0
        %391 = vmatpush.bf16.msra.mxu0 0
        %392 = vmatpush.bf16.msra.mxu0 0
        %393 = vmatpush.bf16.msra.mxu0 %v384
        %394 = vmatmul.bf16.gmra.mxu0 %v335
        %v395 = vpop.f32.mrf.mxu0
        %v396 = vadd.f32 0.0, %v395
        %v397 = vpop.f32.mrf.mxu0
        %v398 = vadd.f32 0.0, %v397
        %399 = vmatmul.bf16.gmra.mxu0 %v338
        %v400 = vpop.f32.mrf.mxu0
        %v401 = vadd.f32 0.0, %v400
        %v402 = vpop.f32.mrf.mxu0
        %v403 = vadd.f32 0.0, %v402
        %404 = vmatmul.bf16.gmra.mxu0 %v341
        %v405 = vpop.f32.mrf.mxu0
        %v406 = vadd.f32 0.0, %v405
        %v407 = vpop.f32.mrf.mxu0
        %v408 = vadd.f32 0.0, %v407
        %409 = vmatmul.bf16.gmra.mxu0 %v344
        %v410 = vpop.f32.mrf.mxu0
        %v411 = vadd.f32 0.0, %v410
        %v412 = vpop.f32.mrf.mxu0
        %v413 = vadd.f32 0.0, %v412
        %414 = vmatmul.bf16.gmra.mxu0 %v347
        %v415 = vpop.f32.mrf.mxu0
        %v416 = vadd.f32 0.0, %v415
        %v417 = vpop.f32.mrf.mxu0
        %v418 = vadd.f32 0.0, %v417
        %419 = vmatmul.bf16.gmra.mxu0 %v350
        %v420 = vpop.f32.mrf.mxu0
        %v421 = vadd.f32 0.0, %v420
        %v422 = vpop.f32.mrf.mxu0
        %v423 = vadd.f32 0.0, %v422
        %424 = vmatmul.bf16.gmra.mxu0 %v353
        %v425 = vpop.f32.mrf.mxu0
        %v426 = vadd.f32 0.0, %v425
        %v427 = vpop.f32.mrf.mxu0
        %v428 = vadd.f32 0.0, %v427
        %429 = vmatmul.bf16.gmra.mxu0 %v356
        %v430 = vpop.f32.mrf.mxu0
        %v431 = vadd.f32 0.0, %v430
        %v432 = vpop.f32.mrf.mxu0
        %v433 = vadd.f32 0.0, %v432
        %434 = vmatmul.bf16.gmra.mxu0 %v359
        %v435 = vpop.f32.mrf.mxu0
        %v436 = vadd.f32 0.0, %v435
        %v437 = vpop.f32.mrf.mxu0
        %v438 = vadd.f32 0.0, %v437
        %439 = vmatmul.bf16.gmra.mxu0 %v362
        %v440 = vpop.f32.mrf.mxu0
        %v441 = vadd.f32 0.0, %v440
        %v442 = vpop.f32.mrf.mxu0
        %v443 = vadd.f32 0.0, %v442
        %444 = vmatmul.bf16.gmra.mxu0 %v365
        %v445 = vpop.f32.mrf.mxu0
        %v446 = vadd.f32 0.0, %v445
        %v447 = vpop.f32.mrf.mxu0
        %v448 = vadd.f32 0.0, %v447
        %449 = vmatmul.bf16.gmra.mxu0 %v368
        %v450 = vpop.f32.mrf.mxu0
        %v451 = vadd.f32 0.0, %v450
        %v452 = vpop.f32.mrf.mxu0
        %v453 = vadd.f32 0.0, %v452
        %454 = vmatmul.bf16.gmra.mxu0 %v371
        %v455 = vpop.f32.mrf.mxu0
        %v456 = vadd.f32 0.0, %v455
        %v457 = vpop.f32.mrf.mxu0
        %v458 = vadd.f32 0.0, %v457
        %459 = vmatmul.bf16.gmra.mxu0 %v374
        %v460 = vpop.f32.mrf.mxu0
        %v461 = vadd.f32 0.0, %v460
        %v462 = vpop.f32.mrf.mxu0
        %v463 = vadd.f32 0.0, %v462
        %464 = vmatmul.bf16.gmra.mxu0 %v377
        %v465 = vpop.f32.mrf.mxu0
        %v466 = vadd.f32 0.0, %v465
        %v467 = vpop.f32.mrf.mxu0
        %v468 = vadd.f32 0.0, %v467
        %469 = vmatmul.bf16.gmra.mxu0 %v380
        %v470 = vpop.f32.mrf.mxu0
        %v471 = vadd.f32 0.0, %v470
        %v472 = vpop.f32.mrf.mxu0
        %v473 = vadd.f32 0.0, %v472
        %474 = vdwg.mxu0
        // Predicated region
        $region41: #{tpu_custom_call.1} parent=35 // pred_check
          %p475 = pneg %p212
        $region42: #{tpu_custom_call.1} parent=35 // pred_check_branch
          %477 = sbr.rel (%p475) target = $region44
        $region43: #{tpu_custom_call.1} parent=35 // pred_region
          %v478 = vld [vmem:[#allocation2] sm:$0x1]
          %v479 = vadd.f32 %v396, %v398
          %v480 = vadd.f32 %v479, %v401
          %v481 = vadd.f32 %v480, %v403
          %v482 = vadd.f32 %v481, %v406
          %v483 = vadd.f32 %v482, %v408
          %v484 = vadd.f32 %v483, %v411
          %v485 = vadd.f32 %v484, %v413
          %v486 = vadd.f32 %v485, %v416
          %v487 = vadd.f32 %v486, %v418
          %v488 = vadd.f32 %v487, %v421
          %v489 = vadd.f32 %v488, %v423
          %v490 = vadd.f32 %v489, %v426
          %v491 = vadd.f32 %v490, %v428
          %v492 = vadd.f32 %v491, %v431
          %v493 = vadd.f32 %v492, %v433
          %v494 = vadd.f32 %v493, %v436
          %v495 = vadd.f32 %v494, %v438
          %v496 = vadd.f32 %v495, %v441
          %v497 = vadd.f32 %v496, %v443
          %v498 = vadd.f32 %v497, %v446
          %v499 = vadd.f32 %v498, %v448
          %v500 = vadd.f32 %v499, %v451
          %v501 = vadd.f32 %v500, %v453
          %v502 = vadd.f32 %v501, %v456
          %v503 = vadd.f32 %v502, %v458
          %v504 = vadd.f32 %v503, %v461
          %v505 = vadd.f32 %v504, %v463
          %v506 = vadd.f32 %v505, %v466
          %v507 = vadd.f32 %v506, %v468
          %v508 = vadd.f32 %v507, %v471
          %v509 = vadd.f32 %v508, %v473
          %v510 = vrot.slane %v509, 4
          %v511 = vadd.f32 %v509, %v510
          %v512 = vrot.slane %v511, 2
          %v513 = vadd.f32 %v511, %v512
          %v514 = vrot.slane %v513, 1
          %v515 = vadd.f32 %v513, %v514
          %v516 = vadd.f32 %v478, %v515
          %517 = vst [vmem:[#allocation2] sm:$0x1] %v516
          %v518 = vld [vmem:[#allocation3] sm:$0x1]
          %v519 = vmul.f32 %v396, %v396
          %v520 = vmul.f32 %v398, %v398
          %v521 = vmul.f32 %v401, %v401
          %v522 = vmul.f32 %v403, %v403
          %v523 = vmul.f32 %v406, %v406
          %v524 = vmul.f32 %v408, %v408
          %v525 = vmul.f32 %v411, %v411
          %v526 = vmul.f32 %v413, %v413
          %v527 = vmul.f32 %v416, %v416
          %v528 = vmul.f32 %v418, %v418
          %v529 = vmul.f32 %v421, %v421
          %v530 = vmul.f32 %v423, %v423
          %v531 = vmul.f32 %v426, %v426
          %v532 = vmul.f32 %v428, %v428
          %v533 = vmul.f32 %v431, %v431
          %v534 = vmul.f32 %v433, %v433
          %v535 = vmul.f32 %v436, %v436
          %v536 = vmul.f32 %v438, %v438
          %v537 = vmul.f32 %v441, %v441
          %v538 = vmul.f32 %v443, %v443
          %v539 = vmul.f32 %v446, %v446
          %v540 = vmul.f32 %v448, %v448
          %v541 = vmul.f32 %v451, %v451
          %v542 = vmul.f32 %v453, %v453
          %v543 = vmul.f32 %v456, %v456
          %v544 = vmul.f32 %v458, %v458
          %v545 = vmul.f32 %v461, %v461
          %v546 = vmul.f32 %v463, %v463
          %v547 = vmul.f32 %v466, %v466
          %v548 = vmul.f32 %v468, %v468
          %v549 = vmul.f32 %v471, %v471
          %v550 = vmul.f32 %v473, %v473
          %v551 = vadd.f32 %v519, %v520
          %v552 = vadd.f32 %v551, %v521
          %v553 = vadd.f32 %v552, %v522
          %v554 = vadd.f32 %v553, %v523
          %v555 = vadd.f32 %v554, %v524
          %v556 = vadd.f32 %v555, %v525
          %v557 = vadd.f32 %v556, %v526
          %v558 = vadd.f32 %v557, %v527
          %v559 = vadd.f32 %v558, %v528
          %v560 = vadd.f32 %v559, %v529
          %v561 = vadd.f32 %v560, %v530
          %v562 = vadd.f32 %v561, %v531
          %v563 = vadd.f32 %v562, %v532
          %v564 = vadd.f32 %v563, %v533
          %v565 = vadd.f32 %v564, %v534
          %v566 = vadd.f32 %v565, %v535
          %v567 = vadd.f32 %v566, %v536
          %v568 = vadd.f32 %v567, %v537
          %v569 = vadd.f32 %v568, %v538
          %v570 = vadd.f32 %v569, %v539
          %v571 = vadd.f32 %v570, %v540
          %v572 = vadd.f32 %v571, %v541
          %v573 = vadd.f32 %v572, %v542
          %v574 = vadd.f32 %v573, %v543
          %v575 = vadd.f32 %v574, %v544
          %v576 = vadd.f32 %v575, %v545
          %v577 = vadd.f32 %v576, %v546
          %v578 = vadd.f32 %v577, %v547
          %v579 = vadd.f32 %v578, %v548
          %v580 = vadd.f32 %v579, %v549
          %v581 = vadd.f32 %v580, %v550
          %v582 = vrot.slane %v581, 4
          %v583 = vadd.f32 %v581, %v582
          %v584 = vrot.slane %v583, 2
          %v585 = vadd.f32 %v583, %v584
          %v586 = vrot.slane %v585, 1
          %v587 = vadd.f32 %v585, %v586
          %v588 = vadd.f32 %v518, %v587
          %589 = vst [vmem:[#allocation3] sm:$0x1] %v588
          %v590 = vpack.c.bf16 %v396, %v396
          %v591 = vpack.c.bf16 %v398, %v398
          %v592 = vpack.c.bf16 %v401, %v401
          %v593 = vpack.c.bf16 %v403, %v403
          %v594 = vpack.c.bf16 %v406, %v406
          %v595 = vpack.c.bf16 %v408, %v408
          %v596 = vpack.c.bf16 %v411, %v411
          %v597 = vpack.c.bf16 %v413, %v413
          %v598 = vpack.c.bf16 %v416, %v416
          %v599 = vpack.c.bf16 %v418, %v418
          %v600 = vpack.c.bf16 %v421, %v421
          %v601 = vpack.c.bf16 %v423, %v423
          %v602 = vpack.c.bf16 %v426, %v426
          %v603 = vpack.c.bf16 %v428, %v428
          %v604 = vpack.c.bf16 %v431, %v431
          %v605 = vpack.c.bf16 %v433, %v433
          %v606 = vpack.c.bf16 %v436, %v436
          %v607 = vpack.c.bf16 %v438, %v438
          %v608 = vpack.c.bf16 %v441, %v441
          %v609 = vpack.c.bf16 %v443, %v443
          %v610 = vpack.c.bf16 %v446, %v446
          %v611 = vpack.c.bf16 %v448, %v448
          %v612 = vpack.c.bf16 %v451, %v451
          %v613 = vpack.c.bf16 %v453, %v453
          %v614 = vpack.c.bf16 %v456, %v456
          %v615 = vpack.c.bf16 %v458, %v458
          %v616 = vpack.c.bf16 %v461, %v461
          %v617 = vpack.c.bf16 %v463, %v463
          %v618 = vpack.c.bf16 %v466, %v466
          %v619 = vpack.c.bf16 %v468, %v468
          %v620 = vpack.c.bf16 %v471, %v471
          %v621 = vpack.c.bf16 %v473, %v473
          %622 = vst [vmem:[%s203] sm:$0xf] %v590
          %623 = vst [vmem:[%s203 + $0x4] sm:$0xf] %v591
          %624 = vst [vmem:[%s203 + $0x8] sm:$0xf] %v592
          %625 = vst [vmem:[%s203 + $0xc] sm:$0xf] %v593
          %626 = vst [vmem:[%s203 + $0x10] sm:$0xf] %v594
          %627 = vst [vmem:[%s203 + $0x14] sm:$0xf] %v595
          %628 = vst [vmem:[%s203 + $0x18] sm:$0xf] %v596
          %629 = vst [vmem:[%s203 + $0x1c] sm:$0xf] %v597
          %630 = vst [vmem:[%s203 + $0x20] sm:$0xf] %v598
          %631 = vst [vmem:[%s203 + $0x24] sm:$0xf] %v599
          %632 = vst [vmem:[%s203 + $0x28] sm:$0xf] %v600
          %633 = vst [vmem:[%s203 + $0x2c] sm:$0xf] %v601
          %634 = vst [vmem:[%s203 + $0x30] sm:$0xf] %v602
          %635 = vst [vmem:[%s203 + $0x34] sm:$0xf] %v603
          %636 = vst [vmem:[%s203 + $0x38] sm:$0xf] %v604
          %637 = vst [vmem:[%s203 + $0x3c] sm:$0xf] %v605
          %638 = vst [vmem:[%s203 + $0x40] sm:$0xf] %v606
          %639 = vst [vmem:[%s203 + $0x44] sm:$0xf] %v607
          %640 = vst [vmem:[%s203 + $0x48] sm:$0xf] %v608
          %641 = vst [vmem:[%s203 + $0x4c] sm:$0xf] %v609
          %642 = vst [vmem:[%s203 + $0x50] sm:$0xf] %v610
          %643 = vst [vmem:[%s203 + $0x54] sm:$0xf] %v611
          %644 = vst [vmem:[%s203 + $0x58] sm:$0xf] %v612
          %645 = vst [vmem:[%s203 + $0x5c] sm:$0xf] %v613
          %646 = vst [vmem:[%s203 + $0x60] sm:$0xf] %v614
          %647 = vst [vmem:[%s203 + $0x64] sm:$0xf] %v615
          %648 = vst [vmem:[%s203 + $0x68] sm:$0xf] %v616
          %649 = vst [vmem:[%s203 + $0x6c] sm:$0xf] %v617
          %650 = vst [vmem:[%s203 + $0x70] sm:$0xf] %v618
          %651 = vst [vmem:[%s203 + $0x74] sm:$0xf] %v619
          %652 = vst [vmem:[%s203 + $0x78] sm:$0xf] %v620
          %653 = vst [vmem:[%s203 + $0x7c] sm:$0xf] %v621
        $region44: #{tpu_custom_call.1} parent=35 // pred_fallthru
          _
        %p654 = scmp.eq.s32.totalorder %s23, 1
        %p655 = pnand %p212, %p654
        %p656 = pneg %p655
        // Predicated region
        $region45: #{tpu_custom_call.1} parent=35 // pred_check
          _
        $region46: #{tpu_custom_call.1} parent=35 // pred_check_branch
          %658 = sbr.rel (%p655) target = $region48
        $region47: #{tpu_custom_call.1} parent=35 // pred_region
          %v659 = vld [vmem:[#allocation2] sm:$0x1]
          %v660 = vmul.f32 %v659, 0.001953125
          %v661 = vld [vmem:[#allocation3] sm:$0x1]
          %v662 = vmul.f32 %v661, 0.001953125
          %v663 = vmul.f32 %v660, %v660
          %v664 = vsub.f32 %v662, %v663
          %665 = vst [vmem:[#allocation2] sm:$0x1] %v660
          %v666 = vadd.f32 %v664, 1e-05
          %v667 = vrsqrt.pop %v666
          %v668 = vmul.f32 %v667, %v666
          %v669 = vmul.f32 %v668, %v667
          %v670 = vmul.f32 0.5, %v669
          %v671 = vsub.f32 1.5, %v670
          %v672 = vmul.f32 %v667, %v671
          %vm673 = vweird.f32 %v666
          %vm674 = vweird.f32 %v667
          %vm675 = vmor %vm673, %vm674
          %v676 = vsel %vm675, %v667, %v672
          %677 = vst [vmem:[#allocation3] sm:$0x1] %v676
        $region48: #{tpu_custom_call.1} parent=35 // pred_fallthru
          _
        %p678 = scmp.eq.s32.totalorder %s22, 1
        // Predicated region
        $region49: #{tpu_custom_call.1} parent=35 // pred_check
          %p679 = pneg %p678
        $region50: #{tpu_custom_call.1} parent=35 // pred_check_branch
          %681 = sbr.rel (%p679) target = $region52
        $region51: #{tpu_custom_call.1} parent=35 // pred_region
          %v682 = vld [vmem:[#allocation2] sm:$0x1]
          %v684 = vperm.slane %v682, 0
          %v686 = vsub.f32 %v396, %v684
          %v687 = vsub.f32 %v398, %v684
          %v688 = vsub.f32 %v401, %v684
          %v689 = vsub.f32 %v403, %v684
          %v690 = vsub.f32 %v406, %v684
          %v691 = vsub.f32 %v408, %v684
          %v692 = vsub.f32 %v411, %v684
          %v693 = vsub.f32 %v413, %v684
          %v694 = vsub.f32 %v416, %v684
          %v695 = vsub.f32 %v418, %v684
          %v696 = vsub.f32 %v421, %v684
          %v697 = vsub.f32 %v423, %v684
          %v698 = vsub.f32 %v426, %v684
          %v699 = vsub.f32 %v428, %v684
          %v700 = vsub.f32 %v431, %v684
          %v701 = vsub.f32 %v433, %v684
          %v702 = vsub.f32 %v436, %v684
          %v703 = vsub.f32 %v438, %v684
          %v704 = vsub.f32 %v441, %v684
          %v705 = vsub.f32 %v443, %v684
          %v706 = vsub.f32 %v446, %v684
          %v707 = vsub.f32 %v448, %v684
          %v708 = vsub.f32 %v451, %v684
          %v709 = vsub.f32 %v453, %v684
          %v710 = vsub.f32 %v456, %v684
          %v711 = vsub.f32 %v458, %v684
          %v712 = vsub.f32 %v461, %v684
          %v713 = vsub.f32 %v463, %v684
          %v714 = vsub.f32 %v466, %v684
          %v715 = vsub.f32 %v468, %v684
          %v716 = vsub.f32 %v471, %v684
          %v717 = vsub.f32 %v473, %v684
          %v718 = vld [vmem:[#allocation3] sm:$0x1]
          %v720 = vperm.slane %v718, 0
          %v722 = vmul.f32 %v686, %v720
          %v723 = vmul.f32 %v687, %v720
          %v724 = vmul.f32 %v688, %v720
          %v725 = vmul.f32 %v689, %v720
          %v726 = vmul.f32 %v690, %v720
          %v727 = vmul.f32 %v691, %v720
          %v728 = vmul.f32 %v692, %v720
          %v729 = vmul.f32 %v693, %v720
          %v730 = vmul.f32 %v694, %v720
          %v731 = vmul.f32 %v695, %v720
          %v732 = vmul.f32 %v696, %v720
          %v733 = vmul.f32 %v697, %v720
          %v734 = vmul.f32 %v698, %v720
          %v735 = vmul.f32 %v699, %v720
          %v736 = vmul.f32 %v700, %v720
          %v737 = vmul.f32 %v701, %v720
          %v738 = vmul.f32 %v702, %v720
          %v739 = vmul.f32 %v703, %v720
          %v740 = vmul.f32 %v704, %v720
          %v741 = vmul.f32 %v705, %v720
          %v742 = vmul.f32 %v706, %v720
          %v743 = vmul.f32 %v707, %v720
          %v744 = vmul.f32 %v708, %v720
          %v745 = vmul.f32 %v709, %v720
          %v746 = vmul.f32 %v710, %v720
          %v747 = vmul.f32 %v711, %v720
          %v748 = vmul.f32 %v712, %v720
          %v749 = vmul.f32 %v713, %v720
          %v750 = vmul.f32 %v714, %v720
          %v751 = vmul.f32 %v715, %v720
          %v752 = vmul.f32 %v716, %v720
          %v753 = vmul.f32 %v717, %v720
          %v754 = vld [vmem:[%s2] sm:$0x1]
          %v756 = vperm.slane %v754, 0
          %v758 = vmul.f32 %v722, %v756
          %v759 = vmul.f32 %v723, %v756
          %v760 = vmul.f32 %v724, %v756
          %v761 = vmul.f32 %v725, %v756
          %v762 = vmul.f32 %v726, %v756
          %v763 = vmul.f32 %v727, %v756
          %v764 = vmul.f32 %v728, %v756
          %v765 = vmul.f32 %v729, %v756
          %v766 = vmul.f32 %v730, %v756
          %v767 = vmul.f32 %v731, %v756
          %v768 = vmul.f32 %v732, %v756
          %v769 = vmul.f32 %v733, %v756
          %v770 = vmul.f32 %v734, %v756
          %v771 = vmul.f32 %v735, %v756
          %v772 = vmul.f32 %v736, %v756
          %v773 = vmul.f32 %v737, %v756
          %v774 = vmul.f32 %v738, %v756
          %v775 = vmul.f32 %v739, %v756
          %v776 = vmul.f32 %v740, %v756
          %v777 = vmul.f32 %v741, %v756
          %v778 = vmul.f32 %v742, %v756
          %v779 = vmul.f32 %v743, %v756
          %v780 = vmul.f32 %v744, %v756
          %v781 = vmul.f32 %v745, %v756
          %v782 = vmul.f32 %v746, %v756
          %v783 = vmul.f32 %v747, %v756
          %v784 = vmul.f32 %v748, %v756
          %v785 = vmul.f32 %v749, %v756
          %v786 = vmul.f32 %v750, %v756
          %v787 = vmul.f32 %v751, %v756
          %v788 = vmul.f32 %v752, %v756
          %v789 = vmul.f32 %v753, %v756
          %v790 = vld [vmem:[%s3] sm:$0x1]
          %v792 = vperm.slane %v790, 0
          %v794 = vadd.f32 %v758, %v792
          %v795 = vadd.f32 %v759, %v792
          %v796 = vadd.f32 %v760, %v792
          %v797 = vadd.f32 %v761, %v792
          %v798 = vadd.f32 %v762, %v792
          %v799 = vadd.f32 %v763, %v792
          %v800 = vadd.f32 %v764, %v792
          %v801 = vadd.f32 %v765, %v792
          %v802 = vadd.f32 %v766, %v792
          %v803 = vadd.f32 %v767, %v792
          %v804 = vadd.f32 %v768, %v792
          %v805 = vadd.f32 %v769, %v792
          %v806 = vadd.f32 %v770, %v792
          %v807 = vadd.f32 %v771, %v792
          %v808 = vadd.f32 %v772, %v792
          %v809 = vadd.f32 %v773, %v792
          %v810 = vadd.f32 %v774, %v792
          %v811 = vadd.f32 %v775, %v792
          %v812 = vadd.f32 %v776, %v792
          %v813 = vadd.f32 %v777, %v792
          %v814 = vadd.f32 %v778, %v792
          %v815 = vadd.f32 %v779, %v792
          %v816 = vadd.f32 %v780, %v792
          %v817 = vadd.f32 %v781, %v792
          %v818 = vadd.f32 %v782, %v792
          %v819 = vadd.f32 %v783, %v792
          %v820 = vadd.f32 %v784, %v792
          %v821 = vadd.f32 %v785, %v792
          %v822 = vadd.f32 %v786, %v792
          %v823 = vadd.f32 %v787, %v792
          %v824 = vadd.f32 %v788, %v792
          %v825 = vadd.f32 %v789, %v792
          %v826 = vmax.f32 %v794, 0.0
          %v827 = vmax.f32 %v795, 0.0
          %v828 = vmax.f32 %v796, 0.0
          %v829 = vmax.f32 %v797, 0.0
          %v830 = vmax.f32 %v798, 0.0
          %v831 = vmax.f32 %v799, 0.0
          %v832 = vmax.f32 %v800, 0.0
          %v833 = vmax.f32 %v801, 0.0
          %v834 = vmax.f32 %v802, 0.0
          %v835 = vmax.f32 %v803, 0.0
          %v836 = vmax.f32 %v804, 0.0
          %v837 = vmax.f32 %v805, 0.0
          %v838 = vmax.f32 %v806, 0.0
          %v839 = vmax.f32 %v807, 0.0
          %v840 = vmax.f32 %v808, 0.0
          %v841 = vmax.f32 %v809, 0.0
          %v842 = vmax.f32 %v810, 0.0
          %v843 = vmax.f32 %v811, 0.0
          %v844 = vmax.f32 %v812, 0.0
          %v845 = vmax.f32 %v813, 0.0
          %v846 = vmax.f32 %v814, 0.0
          %v847 = vmax.f32 %v815, 0.0
          %v848 = vmax.f32 %v816, 0.0
          %v849 = vmax.f32 %v817, 0.0
          %v850 = vmax.f32 %v818, 0.0
          %v851 = vmax.f32 %v819, 0.0
          %v852 = vmax.f32 %v820, 0.0
          %v853 = vmax.f32 %v821, 0.0
          %v854 = vmax.f32 %v822, 0.0
          %v855 = vmax.f32 %v823, 0.0
          %v856 = vmax.f32 %v824, 0.0
          %v857 = vmax.f32 %v825, 0.0
          %v858 = vpack.c.bf16 %v826, %v826
          %v859 = vpack.c.bf16 %v827, %v827
          %v860 = vpack.c.bf16 %v828, %v828
          %v861 = vpack.c.bf16 %v829, %v829
          %v862 = vpack.c.bf16 %v830, %v830
          %v863 = vpack.c.bf16 %v831, %v831
          %v864 = vpack.c.bf16 %v832, %v832
          %v865 = vpack.c.bf16 %v833, %v833
          %v866 = vpack.c.bf16 %v834, %v834
          %v867 = vpack.c.bf16 %v835, %v835
          %v868 = vpack.c.bf16 %v836, %v836
          %v869 = vpack.c.bf16 %v837, %v837
          %v870 = vpack.c.bf16 %v838, %v838
          %v871 = vpack.c.bf16 %v839, %v839
          %v872 = vpack.c.bf16 %v840, %v840
          %v873 = vpack.c.bf16 %v841, %v841
          %v874 = vpack.c.bf16 %v842, %v842
          %v875 = vpack.c.bf16 %v843, %v843
          %v876 = vpack.c.bf16 %v844, %v844
          %v877 = vpack.c.bf16 %v845, %v845
          %v878 = vpack.c.bf16 %v846, %v846
          %v879 = vpack.c.bf16 %v847, %v847
          %v880 = vpack.c.bf16 %v848, %v848
          %v881 = vpack.c.bf16 %v849, %v849
          %v882 = vpack.c.bf16 %v850, %v850
          %v883 = vpack.c.bf16 %v851, %v851
          %v884 = vpack.c.bf16 %v852, %v852
          %v885 = vpack.c.bf16 %v853, %v853
          %v886 = vpack.c.bf16 %v854, %v854
          %v887 = vpack.c.bf16 %v855, %v855
          %v888 = vpack.c.bf16 %v856, %v856
          %v889 = vpack.c.bf16 %v857, %v857
          %890 = vst [vmem:[%s203] sm:$0xf] %v858
          %891 = vst [vmem:[%s203 + $0x4] sm:$0xf] %v859
          %892 = vst [vmem:[%s203 + $0x8] sm:$0xf] %v860
          %893 = vst [vmem:[%s203 + $0xc] sm:$0xf] %v861
          %894 = vst [vmem:[%s203 + $0x10] sm:$0xf] %v862
          %895 = vst [vmem:[%s203 + $0x14] sm:$0xf] %v863
          %896 = vst [vmem:[%s203 + $0x18] sm:$0xf] %v864
          %897 = vst [vmem:[%s203 + $0x1c] sm:$0xf] %v865
          %898 = vst [vmem:[%s203 + $0x20] sm:$0xf] %v866
          %899 = vst [vmem:[%s203 + $0x24] sm:$0xf] %v867
          %900 = vst [vmem:[%s203 + $0x28] sm:$0xf] %v868
          %901 = vst [vmem:[%s203 + $0x2c] sm:$0xf] %v869
          %902 = vst [vmem:[%s203 + $0x30] sm:$0xf] %v870
          %903 = vst [vmem:[%s203 + $0x34] sm:$0xf] %v871
          %904 = vst [vmem:[%s203 + $0x38] sm:$0xf] %v872
          %905 = vst [vmem:[%s203 + $0x3c] sm:$0xf] %v873
          %906 = vst [vmem:[%s203 + $0x40] sm:$0xf] %v874
          %907 = vst [vmem:[%s203 + $0x44] sm:$0xf] %v875
          %908 = vst [vmem:[%s203 + $0x48] sm:$0xf] %v876
          %909 = vst [vmem:[%s203 + $0x4c] sm:$0xf] %v877
          %910 = vst [vmem:[%s203 + $0x50] sm:$0xf] %v878
          %911 = vst [vmem:[%s203 + $0x54] sm:$0xf] %v879
          %912 = vst [vmem:[%s203 + $0x58] sm:$0xf] %v880
          %913 = vst [vmem:[%s203 + $0x5c] sm:$0xf] %v881
          %914 = vst [vmem:[%s203 + $0x60] sm:$0xf] %v882
          %915 = vst [vmem:[%s203 + $0x64] sm:$0xf] %v883
          %916 = vst [vmem:[%s203 + $0x68] sm:$0xf] %v884
          %917 = vst [vmem:[%s203 + $0x6c] sm:$0xf] %v885
          %918 = vst [vmem:[%s203 + $0x70] sm:$0xf] %v886
          %919 = vst [vmem:[%s203 + $0x74] sm:$0xf] %v887
          %920 = vst [vmem:[%s203 + $0x78] sm:$0xf] %v888
          %921 = vst [vmem:[%s203 + $0x7c] sm:$0xf] %v889
        $region52: #{tpu_custom_call.1} parent=35 // pred_fallthru
          _
        %s922 = sand.u32 %s127, 1
        %s923 = scalar_lea.sflag [#allocation5], %s922
        %s924 = sand.u32 %s127, 1
        %s925 = smul.addr %s924, 128
        %s926 = scalar_lea.vmem [#allocation4], %s925
        // Predicated region
        $region53: #{tpu_custom_call.1} parent=35 // pred_check
          %p927 = pneg %p137
        $region54: #{tpu_custom_call.1} parent=35 // pred_check_branch
          %929 = sbr.rel (%p927) target = $region56
        $region55: #{tpu_custom_call.1} parent=35 // pred_region
          %s930 = smul.u32 32, %s23
          %932 = vsyncadd %s923, 0
          %s933 = smul.addr %s930, 4
          %s934 = scalar_lea.hbm %s4, %s933
          %s935 = sshll.u32 %s926, 4
          %s936 = int_to_ptr.vmem [resolvable:$true] %s935
          %s937 = sshll.u32 %s934, 4
          %s938 = int_to_ptr.hbm [resolvable:$true] %s937
          %943 = dma.vmem_to_hbm [thread:$0]  %s936, 2048, %s938, %s923, 64, 64, 4
        $region56: #{tpu_custom_call.1} parent=35 // pred_fallthru
          _
      $region36: #{tpu_custom_call.1} parent=5 // pred_fallthru
        _
      %p944 = scmp.le.s32.totalorder 2, %s13
      // Predicated region
      $region57: #{tpu_custom_call.1} parent=5 // pred_check
        %p945 = pneg %p944
      $region58: #{tpu_custom_call.1} parent=5 // pred_check_branch
        %947 = sbr.rel (%p945) target = $region60
      $region59: #{tpu_custom_call.1} parent=5 // pred_region
        %s948 = ssub.s32 %s13, 2
        // Predicated region
        $region61: #{tpu_custom_call.1} parent=59 // pred_check
          %p949 = pneg %p143
        $region62: #{tpu_custom_call.1} parent=59 // pred_check_branch
          %951 = sbr.rel (%p949) target = $region64
        $region63: #{tpu_custom_call.1} parent=59 // pred_region
          %s952 = sand.u32 %s128, 1
          %s953 = scalar_lea.sflag [#allocation5], %s952
          %s954 = sand.u32 %s128, 1
          %s955 = smul.addr %s954, 128
          %s956 = scalar_lea.vmem [#allocation4], %s955
          %958 = dma.done %s953, 2048
        $region64: #{tpu_custom_call.1} parent=59 // pred_fallthru
          _
      $region60: #{tpu_custom_call.1} parent=5 // pred_fallthru
        _
    $region6: #{tpu_custom_call.1} parent=1 // loop_footer
      %s17 = sadd.s32 1, %s13
    $region7: #{tpu_custom_call.1} parent=1 // loop_footer_branch
      %12 = sbr.rel target = $region3
    $region8: #{tpu_custom_call.1} parent=1 // loop_exit
      _
    %959 = vsyncpa [#allocation5], 1
    %s960 = scalar_lea.sflag [#allocation5], 1
    %961 = vsyncpa %s960, 1

</llo_original>
